<compile_context>
chip_gen: v5e
topology: v5e:2x2
jax: 0.10.0
libtpu: 0.0.40
codegen_flags: <defaults>
</compile_context>

<pallas_src>
import jax
import jax.numpy as jnp
from jax.experimental import pallas as pl
from jax.experimental.pallas import tpu as pltpu


def _round_up(x, m):
    return ((x + m - 1) // m) * m


def _ae_kernel(x_ref,
               w1_ref, b1_ref,
               w2_ref, b2_ref,
               w3_ref, b3_ref,
               w4_ref, b4_ref,
               o_ref):
    # x_ref: [bt, n_dims] batch-major tile (contiguous HBM DMA, no wrapper
    # transpose).  Weights stay in PyTorch layout [out_features, in_features];
    # biases are [out_features, 1] columns (lane-broadcast).
    x = x_ref[...]                                                    # [bt, n_dims]

    # encode: Linear(n_dims, 12) + ReLU.
    # Fold the layout switch into an NT matmul: h1[f, b] = sum_d W1[f, d] * x[b, d]
    # -> result is already feature-major [12, bt]; no explicit input transpose.
    h1 = jax.lax.dot_general(
        w1_ref[...], x, (((1,), (1,)), ((), ())),
        preferred_element_type=jnp.float32) + b1_ref[...]             # [12, bt]
    h1 = jnp.maximum(h1, 0.0)                                         # lane-dense relu

    # encode: Linear(12, n_latent)             ->  z = W2 @ h1 + b2
    z = jnp.dot(w2_ref[...], h1, preferred_element_type=jnp.float32) + b2_ref[...]
                                                                      # [n_latent, bt]
    # decode: Linear(n_latent, 12) + ReLU      ->  h2 = W3 @ z + b3
    h2 = jnp.dot(w3_ref[...], z, preferred_element_type=jnp.float32) + b3_ref[...]
    h2 = jnp.maximum(h2, 0.0)                                         # [12, bt]

    # decode: Linear(12, n_dims) + Tanh        ->  y = W4 @ h2 + b4
    # Tanh runs on the lane-dense feature-major layout (full EUP vregs).
    y = jnp.tanh(
        jnp.dot(w4_ref[...], h2, preferred_element_type=jnp.float32) + b4_ref[...]
    )                                                                 # [n_dims, bt]

    # Single in-kernel (XLU) transpose back to batch-major for the contiguous
    # HBM writeback of this tile.
    o_ref[...] = y.T.astype(o_ref.dtype)                              # [bt, n_dims]


def _pick_batch_tile(B, requested):
    # ~1 MiB per f32 I/O buffer at bt=8192; double-buffered in+out plus the
    # in-kernel intermediates stays ~9 MiB -> fits the default scoped-VMEM
    # limit on v5e (16 MiB), v6e (32 MiB) and v7x (32 MiB of 64 MiB physical).
    bt = _round_up(min(max(int(requested), 1), 8192), 128)
    # Never use a tile (much) larger than the batch itself.
    bt = min(bt, _round_up(B, 128))
    # Keep >= 2 grid steps when the batch allows it so ("parallel",) grid
    # sharding can use both TensorCores on v7x.
    if B > 128:
        bt = min(bt, _round_up(pl.cdiv(B, 2), 128))
    return max(bt, 128)


def simple_autoencoder_forward(x, params, *, batch_tile=8192):
    """Fused autoencoder forward.

    x:      [B, n_dims] float32 (batch-major, as in the PyTorch module).
    params: dict of (weight, bias) per layer, PyTorch layout:
            weight [out_features, in_features], bias [out_features, 1].
    """
    B, n_dims = x.shape

    w1, b1 = params["enc1"]
    w2, b2 = params["enc2"]
    w3, b3 = params["dec1"]
    w4, b4 = params["dec2"]
    n_latent = w2.shape[0]

    bt = _pick_batch_tile(B, batch_tile)
    grid = (pl.cdiv(B, bt),)   # ragged tail tile handled by Pallas block clamping

    # Advisory cost estimate so XLA schedules neighbors around the call.
    flops = 2 * B * (n_dims * 12 + 12 * n_latent + n_latent * 12 + 12 * n_dims)
    param_bytes = sum(int(a.size) * a.dtype.itemsize
                      for a in (w1, b1, w2, b2, w3, b3, w4, b4))
    bytes_accessed = 2 * B * n_dims * x.dtype.itemsize + param_bytes
    cost = pl.CostEstimate(flops=flops,
                           transcendentals=B * n_dims,
                           bytes_accessed=bytes_accessed)

    def const_spec(shape):
        # Weights / biases: full (tiny) array, VMEM-resident across all steps.
        return pl.BlockSpec(shape, lambda i: (0, 0))

    out = pl.pallas_call(
        _ae_kernel,
        out_shape=jax.ShapeDtypeStruct((B, n_dims), x.dtype),
        grid_spec=pltpu.PrefetchScalarGridSpec(
            num_scalar_prefetch=0,
            grid=grid,
            in_specs=[
                pl.BlockSpec((bt, n_dims), lambda i: (i, 0)),   # x, batch-major tiles
                const_spec(w1.shape), const_spec(b1.shape),
                const_spec(w2.shape), const_spec(b2.shape),
                const_spec(w3.shape), const_spec(b3.shape),
                const_spec(w4.shape), const_spec(b4.shape),
            ],
            out_specs=pl.BlockSpec((bt, n_dims), lambda i: (i, 0)),
        ),
        compiler_params=pltpu.CompilerParams(
            dimension_semantics=("parallel",)),   # megacore-shardable grid
        cost_estimate=cost,
    )(x, w1, b1, w2, b2, w3, b3, w4, b4)

    return out


def init_params(key, n_dims, n_latent_space, dtype=jnp.float32):
    """nn.Linear-style U(-1/sqrt(fan_in), 1/sqrt(fan_in)) init.

    Weights kept in PyTorch layout [out_features, in_features];
    biases are [out_features, 1] columns (for feature-major broadcast).
    """
    dims = [
        ("enc1", n_dims, 12),
        ("enc2", 12, n_latent_space),
        ("dec1", n_latent_space, 12),
        ("dec2", 12, n_dims),
    ]
    params = {}
    for name, fan_in, fan_out in dims:
        key, kw, kb = jax.random.split(key, 3)
        bound = 1.0 / jnp.sqrt(float(fan_in))
        w = jax.random.uniform(kw, (fan_out, fan_in), dtype, -bound, bound)
        b = jax.random.uniform(kb, (fan_out, 1), dtype, -bound, bound)
        params[name] = (w, b)
    return params


def _reference_forward(x, params):
    w1, b1 = params["enc1"]
    w2, b2 = params["enc2"]
    w3, b3 = params["dec1"]
    w4, b4 = params["dec2"]
    h = jnp.maximum(x @ w1.T + b1.T, 0.0)
    z = h @ w2.T + b2.T
    h = jnp.maximum(z @ w3.T + b3.T, 0.0)
    return jnp.tanh(h @ w4.T + b4.T)


if __name__ == "__main__":
    key = jax.random.PRNGKey(0)
    n_dims = 32          # input feature size
    n_latent_space = 8   # latent dim
    batch = 300          # NOT a tile multiple: exercises the ragged tail tile

    kp, kx = jax.random.split(key)
    params = init_params(kp, n_dims, n_latent_space)
    x = jax.random.normal(kx, (batch, n_dims), jnp.float32)

    # With defaults: bt=256 -> grid=(2,) (two parallel steps, 44-row ragged tail).
    out = simple_autoencoder_forward(x, params)
    out = jax.block_until_ready(out)

    ref = _reference_forward(x, params)
    assert out.shape == (batch, n_dims)
    assert jnp.allclose(out, ref, atol=1e-5, rtol=1e-5), "mismatch vs reference"

    print("KERNEL_OK")
</pallas_src>

<mosaic_0001>
module attributes {stable_mosaic.version = 11 : i64} {
  func.func @_ae_kernel(%arg0: i32, %arg1: memref<256x32xf32, #tpu.memory_space<vmem>>, %arg2: memref<12x32xf32, #tpu.memory_space<vmem>>, %arg3: memref<12x1xf32, #tpu.memory_space<vmem>>, %arg4: memref<8x12xf32, #tpu.memory_space<vmem>>, %arg5: memref<8x1xf32, #tpu.memory_space<vmem>>, %arg6: memref<12x8xf32, #tpu.memory_space<vmem>>, %arg7: memref<12x1xf32, #tpu.memory_space<vmem>>, %arg8: memref<32x12xf32, #tpu.memory_space<vmem>>, %arg9: memref<32x1xf32, #tpu.memory_space<vmem>>, %arg10: memref<256x32xf32, #tpu.memory_space<vmem>>) attributes {dimension_semantics = [#tpu.dimension_semantics<parallel>], iteration_bounds = array<i64: 2>, scalar_prefetch = 0 : i64, scratch_operands = 0 : i64, tpu.core_type = #tpu.core_type<tc>, window_params = [{transform_indices = @transform_0, window_bounds = array<i64: 256, 32>}, {pipeline_mode = #tpu.pipeline_mode<synchronous>, transform_indices = @transform_1, window_bounds = array<i64: 12, 32>}, {pipeline_mode = #tpu.pipeline_mode<synchronous>, transform_indices = @transform_2, window_bounds = array<i64: 12, 1>}, {pipeline_mode = #tpu.pipeline_mode<synchronous>, transform_indices = @transform_3, window_bounds = array<i64: 8, 12>}, {pipeline_mode = #tpu.pipeline_mode<synchronous>, transform_indices = @transform_4, window_bounds = array<i64: 8, 1>}, {pipeline_mode = #tpu.pipeline_mode<synchronous>, transform_indices = @transform_5, window_bounds = array<i64: 12, 8>}, {pipeline_mode = #tpu.pipeline_mode<synchronous>, transform_indices = @transform_6, window_bounds = array<i64: 12, 1>}, {pipeline_mode = #tpu.pipeline_mode<synchronous>, transform_indices = @transform_7, window_bounds = array<i64: 32, 12>}, {pipeline_mode = #tpu.pipeline_mode<synchronous>, transform_indices = @transform_8, window_bounds = array<i64: 32, 1>}, {transform_indices = @transform_9, window_bounds = array<i64: 256, 32>}]} {
    %c0 = arith.constant 0 : index
    %c0_0 = arith.constant 0 : index
    %0 = vector.load %arg1[%c0, %c0_0] : memref<256x32xf32, #tpu.memory_space<vmem>>, vector<256x32xf32>
    %c0_1 = arith.constant 0 : index
    %c0_2 = arith.constant 0 : index
    %1 = vector.load %arg2[%c0_1, %c0_2] : memref<12x32xf32, #tpu.memory_space<vmem>>, vector<12x32xf32>
    %cst = arith.constant dense<0.000000e+00> : vector<12x256xf32>
    %2 = tpu.matmul %1, %0, %cst {dimension_numbers = #tpu.dot_dimension_numbers<[1], [1], [0], [0], [0, 0, 1, 0], [], []>} : vector<12x32xf32>, vector<256x32xf32>, vector<12x256xf32> -> vector<12x256xf32>
    %c0_3 = arith.constant 0 : index
    %c0_4 = arith.constant 0 : index
    %3 = vector.load %arg3[%c0_3, %c0_4] : memref<12x1xf32, #tpu.memory_space<vmem>>, vector<12x1xf32>
    %4 = vector.broadcast %3 : vector<12x1xf32> to vector<12x256xf32>
    %5 = arith.addf %2, %4 : vector<12x256xf32>
    %cst_5 = arith.constant 0.000000e+00 : f32
    %6 = vector.broadcast %cst_5 : f32 to vector<12x256xf32>
    %7 = arith.maximumf %5, %6 : vector<12x256xf32>
    %c0_6 = arith.constant 0 : index
    %c0_7 = arith.constant 0 : index
    %8 = vector.load %arg4[%c0_6, %c0_7] : memref<8x12xf32, #tpu.memory_space<vmem>>, vector<8x12xf32>
    %cst_8 = arith.constant dense<0.000000e+00> : vector<8x256xf32>
    %9 = tpu.matmul %8, %7, %cst_8 {dimension_numbers = #tpu.dot_dimension_numbers<[1], [0], [0], [1], [0, 0, 1, 1], [], []>} : vector<8x12xf32>, vector<12x256xf32>, vector<8x256xf32> -> vector<8x256xf32>
    %c0_9 = arith.constant 0 : index
    %c0_10 = arith.constant 0 : index
    %10 = vector.load %arg5[%c0_9, %c0_10] : memref<8x1xf32, #tpu.memory_space<vmem>>, vector<8x1xf32>
    %11 = vector.broadcast %10 : vector<8x1xf32> to vector<8x256xf32>
    %12 = arith.addf %9, %11 : vector<8x256xf32>
    %c0_11 = arith.constant 0 : index
    %c0_12 = arith.constant 0 : index
    %13 = vector.load %arg6[%c0_11, %c0_12] : memref<12x8xf32, #tpu.memory_space<vmem>>, vector<12x8xf32>
    %cst_13 = arith.constant dense<0.000000e+00> : vector<12x256xf32>
    %14 = tpu.matmul %13, %12, %cst_13 {dimension_numbers = #tpu.dot_dimension_numbers<[1], [0], [0], [1], [0, 0, 1, 1], [], []>} : vector<12x8xf32>, vector<8x256xf32>, vector<12x256xf32> -> vector<12x256xf32>
    %c0_14 = arith.constant 0 : index
    %c0_15 = arith.constant 0 : index
    %15 = vector.load %arg7[%c0_14, %c0_15] : memref<12x1xf32, #tpu.memory_space<vmem>>, vector<12x1xf32>
    %16 = vector.broadcast %15 : vector<12x1xf32> to vector<12x256xf32>
    %17 = arith.addf %14, %16 : vector<12x256xf32>
    %cst_16 = arith.constant 0.000000e+00 : f32
    %18 = vector.broadcast %cst_16 : f32 to vector<12x256xf32>
    %19 = arith.maximumf %17, %18 : vector<12x256xf32>
    %c0_17 = arith.constant 0 : index
    %c0_18 = arith.constant 0 : index
    %20 = vector.load %arg8[%c0_17, %c0_18] : memref<32x12xf32, #tpu.memory_space<vmem>>, vector<32x12xf32>
    %cst_19 = arith.constant dense<0.000000e+00> : vector<32x256xf32>
    %21 = tpu.matmul %20, %19, %cst_19 {dimension_numbers = #tpu.dot_dimension_numbers<[1], [0], [0], [1], [0, 0, 1, 1], [], []>} : vector<32x12xf32>, vector<12x256xf32>, vector<32x256xf32> -> vector<32x256xf32>
    %c0_20 = arith.constant 0 : index
    %c0_21 = arith.constant 0 : index
    %22 = vector.load %arg9[%c0_20, %c0_21] : memref<32x1xf32, #tpu.memory_space<vmem>>, vector<32x1xf32>
    %23 = vector.broadcast %22 : vector<32x1xf32> to vector<32x256xf32>
    %24 = arith.addf %21, %23 : vector<32x256xf32>
    %25 = math.tanh %24 : vector<32x256xf32>
    %26 = tpu.transpose %25, [1, 0] : vector<32x256xf32> -> vector<256x32xf32>
    %c0_22 = arith.constant 0 : index
    %c0_23 = arith.constant 0 : index
    %27 = vector.load %arg10[%c0_22, %c0_23] : memref<256x32xf32, #tpu.memory_space<vmem>>, vector<256x32xf32>
    tpu.vector_store %arg10[%c0_22, %c0_23], %26 {strides = array<i32>} : memref<256x32xf32, #tpu.memory_space<vmem>>, vector<256x32xf32>,
    return
  }
  func.func @transform_0(%arg0: i32) -> (i32, i32) {
    %c0_i32 = arith.constant 0 : i32
    %c0_i32_0 = arith.constant 0 : i32
    return %arg0, %c0_i32 : i32, i32
  }
  func.func @transform_1(%arg0: i32) -> (i32, i32) {
    %c0_i32 = arith.constant 0 : i32
    %c0_i32_0 = arith.constant 0 : i32
    %c0_i32_1 = arith.constant 0 : i32
    return %c0_i32, %c0_i32_0 : i32, i32
  }
  func.func @transform_2(%arg0: i32) -> (i32, i32) {
    %c0_i32 = arith.constant 0 : i32
    %c0_i32_0 = arith.constant 0 : i32
    %c0_i32_1 = arith.constant 0 : i32
    return %c0_i32, %c0_i32_0 : i32, i32
  }
  func.func @transform_3(%arg0: i32) -> (i32, i32) {
    %c0_i32 = arith.constant 0 : i32
    %c0_i32_0 = arith.constant 0 : i32
    %c0_i32_1 = arith.constant 0 : i32
    return %c0_i32, %c0_i32_0 : i32, i32
  }
  func.func @transform_4(%arg0: i32) -> (i32, i32) {
    %c0_i32 = arith.constant 0 : i32
    %c0_i32_0 = arith.constant 0 : i32
    %c0_i32_1 = arith.constant 0 : i32
    return %c0_i32, %c0_i32_0 : i32, i32
  }
  func.func @transform_5(%arg0: i32) -> (i32, i32) {
    %c0_i32 = arith.constant 0 : i32
    %c0_i32_0 = arith.constant 0 : i32
    %c0_i32_1 = arith.constant 0 : i32
    return %c0_i32, %c0_i32_0 : i32, i32
  }
  func.func @transform_6(%arg0: i32) -> (i32, i32) {
    %c0_i32 = arith.constant 0 : i32
    %c0_i32_0 = arith.constant 0 : i32
    %c0_i32_1 = arith.constant 0 : i32
    return %c0_i32, %c0_i32_0 : i32, i32
  }
  func.func @transform_7(%arg0: i32) -> (i32, i32) {
    %c0_i32 = arith.constant 0 : i32
    %c0_i32_0 = arith.constant 0 : i32
    %c0_i32_1 = arith.constant 0 : i32
    return %c0_i32, %c0_i32_0 : i32, i32
  }
  func.func @transform_8(%arg0: i32) -> (i32, i32) {
    %c0_i32 = arith.constant 0 : i32
    %c0_i32_0 = arith.constant 0 : i32
    %c0_i32_1 = arith.constant 0 : i32
    return %c0_i32, %c0_i32_0 : i32, i32
  }
  func.func @transform_9(%arg0: i32) -> (i32, i32) {
    %c0_i32 = arith.constant 0 : i32
    %c0_i32_0 = arith.constant 0 : i32
    return %arg0, %c0_i32 : i32, i32
  }
}

</mosaic_0001>

<llo_original>
// kernel: tpu_custom_call.1
$region0: #{tpu_custom_call.1}
  #allocation0 [shape = 'u32[]', space=smem, size = 0x4, offset = 0x4, fixed_abs, tag = 'smem constant byte address 0x4 - core index']
  #allocation1 [shape = 'u32[72,128]{1,0:T(1,128)}', space=vmem, size = 0x9000, scoped, tag = 'internal scratch']
  %s0 = inlined_call_operand.vmem [shape: f32[300,32], index: 0, kind: input, shape index: {}]
  %s1 = inlined_call_operand.vmem [shape: f32[12,32], index: 1, kind: input, shape index: {}]
  %s2 = inlined_call_operand.vmem [shape: f32[12,1], index: 2, kind: input, shape index: {}]
  %s3 = inlined_call_operand.vmem [shape: f32[8,12], index: 3, kind: input, shape index: {}]
  %s4 = inlined_call_operand.vmem [shape: f32[8,1], index: 4, kind: input, shape index: {}]
  %s5 = inlined_call_operand.vmem [shape: f32[12,8], index: 5, kind: input, shape index: {}]
  %s6 = inlined_call_operand.vmem [shape: f32[12,1], index: 6, kind: input, shape index: {}]
  %s7 = inlined_call_operand.vmem [shape: f32[32,12], index: 7, kind: input, shape index: {}]
  %s8 = inlined_call_operand.vmem [shape: f32[32,1], index: 8, kind: input, shape index: {}]
  %s9 = inlined_call_operand.vmem [shape: f32[300,32], index: 9, kind: output, shape index: {}]
  %s10 = sld [smem:[#allocation0]]
  $region117: #{tpu_custom_call.1} parent=0
    _
  %s12 = ssub.s32 1, %s10
  %s13 = scalar_select 0, %s12, %s10
  $region1: #{tpu_custom_call.1} parent=0
    #allocation2 [shape = 'u8[262144]{0}', space=vmem, size = 0x40000, scoped, tag = 'output window, operand 0']
    loop: start=0, step=1, limit=4
    $region2: #{tpu_custom_call.1} parent=1 // loop_pre_header
      _
    $region3: #{tpu_custom_call.1} parent=1 // loop_header
      %s15 = sphi 0, %s19
      %p16 = scmp.ge.s32.totalorder %s15, 4
      %s25 = sphi 0, %s27
      %s28 = sphi 0, %s25
      %s29 = sphi 0, %s28
      %s45 = sphi 0, %s29
      %s49 = sphi 0, %s49
      %s51 = sphi 0, %s49
      %s52 = sphi 0, %s51
      %s66 = sphi 0, %s52
      %s70 = sphi 0, %s70
      %s72 = sphi 0, %s70
      %s73 = sphi 0, %s72
      %s87 = sphi 0, %s73
      %s91 = sphi 0, %s91
      %s93 = sphi 0, %s91
      %s94 = sphi 0, %s93
      %s108 = sphi 0, %s94
      %s112 = sphi 0, %s112
      %s114 = sphi 0, %s112
      %s115 = sphi 0, %s114
      %s129 = sphi 0, %s115
      %s133 = sphi 0, %s133
      %s135 = sphi 0, %s133
      %s136 = sphi 0, %s135
      %s150 = sphi 0, %s136
      %s154 = sphi 0, %s154
      %s156 = sphi 0, %s154
      %s157 = sphi 0, %s156
      %s171 = sphi 0, %s157
      %s175 = sphi 0, %s175
      %s177 = sphi 0, %s175
      %s178 = sphi 0, %s177
      %s192 = sphi 0, %s178
      %s196 = sphi 0, %s196
      %s198 = sphi 0, %s196
      %s199 = sphi 0, %s198
      %s213 = sphi 0, %s199
      %s219 = sphi 0, %s221
      %s222 = sphi 0, %s219
      %s223 = sphi 0, %s222
      %s239 = sphi 0, %s223
    $region4: #{tpu_custom_call.1} parent=1 // loop_header_branch
      %18 = sbr.rel (%p16) target = $region8
    $region5: #{tpu_custom_call.1} parent=1 // loop_body
      %s20 = ssub.s32 %s15, 1
      %s21 = ssub.s32 %s15, 2
      %s22 = sadd.s32 %s15, 1
      %s23 = ssub.s32 %s15, %s22
      %p24 = scmp.eq.s32.totalorder %s23, 0
      %s26 = sadd.s32 %s25, 1
      %s27 = scalar_select %p24, %s25, %s26
      %p30 = pneg %p24
      %p31 = scmp.eq.s32.totalorder %s15, 1
      %p32 = por %p30, %p31
      %p33 = scmp.ne.s32.totalorder %s25, %s28
      %p34 = scmp.eq.s32.totalorder %s15, 0
      %p35 = por %p33, %p34
      %p36 = scmp.ne.s32.totalorder %s25, %s28
      %p37 = scmp.eq.s32.totalorder %s20, 1
      %p38 = por %p36, %p37
      %p39 = scmp.ne.s32.totalorder %s28, %s29
      %p40 = scmp.eq.s32.totalorder %s20, 0
      %p41 = por %p39, %p40
      %p42 = scmp.ne.s32.totalorder %s28, %s29
      %p43 = scmp.eq.s32.totalorder %s21, 1
      %p44 = por %p42, %p43
      %p46 = scmp.ne.s32.totalorder %s29, %s45
      %p47 = scmp.eq.s32.totalorder %s21, 0
      %p48 = por %p46, %p47
      %s50 = sadd.s32 %s49, 1
      %p53 = scmp.eq.s32.totalorder %s15, 1
      %p54 = scmp.ne.s32.totalorder %s49, %s51
      %p55 = scmp.eq.s32.totalorder %s15, 0
      %p56 = por %p54, %p55
      %p57 = scmp.ne.s32.totalorder %s49, %s51
      %p58 = scmp.eq.s32.totalorder %s20, 1
      %p59 = por %p57, %p58
      %p60 = scmp.ne.s32.totalorder %s51, %s52
      %p61 = scmp.eq.s32.totalorder %s20, 0
      %p62 = por %p60, %p61
      %p63 = scmp.ne.s32.totalorder %s51, %s52
      %p64 = scmp.eq.s32.totalorder %s21, 1
      %p65 = por %p63, %p64
      %p67 = scmp.ne.s32.totalorder %s52, %s66
      %p68 = scmp.eq.s32.totalorder %s21, 0
      %p69 = por %p67, %p68
      %s71 = sadd.s32 %s70, 1
      %p74 = scmp.eq.s32.totalorder %s15, 1
      %p75 = scmp.ne.s32.totalorder %s70, %s72
      %p76 = scmp.eq.s32.totalorder %s15, 0
      %p77 = por %p75, %p76
      %p78 = scmp.ne.s32.totalorder %s70, %s72
      %p79 = scmp.eq.s32.totalorder %s20, 1
      %p80 = por %p78, %p79
      %p81 = scmp.ne.s32.totalorder %s72, %s73
      %p82 = scmp.eq.s32.totalorder %s20, 0
      %p83 = por %p81, %p82
      %p84 = scmp.ne.s32.totalorder %s72, %s73
      %p85 = scmp.eq.s32.totalorder %s21, 1
      %p86 = por %p84, %p85
      %p88 = scmp.ne.s32.totalorder %s73, %s87
      %p89 = scmp.eq.s32.totalorder %s21, 0
      %p90 = por %p88, %p89
      %s92 = sadd.s32 %s91, 1
      %p95 = scmp.eq.s32.totalorder %s15, 1
      %p96 = scmp.ne.s32.totalorder %s91, %s93
      %p97 = scmp.eq.s32.totalorder %s15, 0
      %p98 = por %p96, %p97
      %p99 = scmp.ne.s32.totalorder %s91, %s93
      %p100 = scmp.eq.s32.totalorder %s20, 1
      %p101 = por %p99, %p100
      %p102 = scmp.ne.s32.totalorder %s93, %s94
      %p103 = scmp.eq.s32.totalorder %s20, 0
      %p104 = por %p102, %p103
      %p105 = scmp.ne.s32.totalorder %s93, %s94
      %p106 = scmp.eq.s32.totalorder %s21, 1
      %p107 = por %p105, %p106
      %p109 = scmp.ne.s32.totalorder %s94, %s108
      %p110 = scmp.eq.s32.totalorder %s21, 0
      %p111 = por %p109, %p110
      %s113 = sadd.s32 %s112, 1
      %p116 = scmp.eq.s32.totalorder %s15, 1
      %p117 = scmp.ne.s32.totalorder %s112, %s114
      %p118 = scmp.eq.s32.totalorder %s15, 0
      %p119 = por %p117, %p118
      %p120 = scmp.ne.s32.totalorder %s112, %s114
      %p121 = scmp.eq.s32.totalorder %s20, 1
      %p122 = por %p120, %p121
      %p123 = scmp.ne.s32.totalorder %s114, %s115
      %p124 = scmp.eq.s32.totalorder %s20, 0
      %p125 = por %p123, %p124
      %p126 = scmp.ne.s32.totalorder %s114, %s115
      %p127 = scmp.eq.s32.totalorder %s21, 1
      %p128 = por %p126, %p127
      %p130 = scmp.ne.s32.totalorder %s115, %s129
      %p131 = scmp.eq.s32.totalorder %s21, 0
      %p132 = por %p130, %p131
      %s134 = sadd.s32 %s133, 1
      %p137 = scmp.eq.s32.totalorder %s15, 1
      %p138 = scmp.ne.s32.totalorder %s133, %s135
      %p139 = scmp.eq.s32.totalorder %s15, 0
      %p140 = por %p138, %p139
      %p141 = scmp.ne.s32.totalorder %s133, %s135
      %p142 = scmp.eq.s32.totalorder %s20, 1
      %p143 = por %p141, %p142
      %p144 = scmp.ne.s32.totalorder %s135, %s136
      %p145 = scmp.eq.s32.totalorder %s20, 0
      %p146 = por %p144, %p145
      %p147 = scmp.ne.s32.totalorder %s135, %s136
      %p148 = scmp.eq.s32.totalorder %s21, 1
      %p149 = por %p147, %p148
      %p151 = scmp.ne.s32.totalorder %s136, %s150
      %p152 = scmp.eq.s32.totalorder %s21, 0
      %p153 = por %p151, %p152
      %s155 = sadd.s32 %s154, 1
      %p158 = scmp.eq.s32.totalorder %s15, 1
      %p159 = scmp.ne.s32.totalorder %s154, %s156
      %p160 = scmp.eq.s32.totalorder %s15, 0
      %p161 = por %p159, %p160
      %p162 = scmp.ne.s32.totalorder %s154, %s156
      %p163 = scmp.eq.s32.totalorder %s20, 1
      %p164 = por %p162, %p163
      %p165 = scmp.ne.s32.totalorder %s156, %s157
      %p166 = scmp.eq.s32.totalorder %s20, 0
      %p167 = por %p165, %p166
      %p168 = scmp.ne.s32.totalorder %s156, %s157
      %p169 = scmp.eq.s32.totalorder %s21, 1
      %p170 = por %p168, %p169
      %p172 = scmp.ne.s32.totalorder %s157, %s171
      %p173 = scmp.eq.s32.totalorder %s21, 0
      %p174 = por %p172, %p173
      %s176 = sadd.s32 %s175, 1
      %p179 = scmp.eq.s32.totalorder %s15, 1
      %p180 = scmp.ne.s32.totalorder %s175, %s177
      %p181 = scmp.eq.s32.totalorder %s15, 0
      %p182 = por %p180, %p181
      %p183 = scmp.ne.s32.totalorder %s175, %s177
      %p184 = scmp.eq.s32.totalorder %s20, 1
      %p185 = por %p183, %p184
      %p186 = scmp.ne.s32.totalorder %s177, %s178
      %p187 = scmp.eq.s32.totalorder %s20, 0
      %p188 = por %p186, %p187
      %p189 = scmp.ne.s32.totalorder %s177, %s178
      %p190 = scmp.eq.s32.totalorder %s21, 1
      %p191 = por %p189, %p190
      %p193 = scmp.ne.s32.totalorder %s178, %s192
      %p194 = scmp.eq.s32.totalorder %s21, 0
      %p195 = por %p193, %p194
      %s197 = sadd.s32 %s196, 1
      %p200 = scmp.eq.s32.totalorder %s15, 1
      %p201 = scmp.ne.s32.totalorder %s196, %s198
      %p202 = scmp.eq.s32.totalorder %s15, 0
      %p203 = por %p201, %p202
      %p204 = scmp.ne.s32.totalorder %s196, %s198
      %p205 = scmp.eq.s32.totalorder %s20, 1
      %p206 = por %p204, %p205
      %p207 = scmp.ne.s32.totalorder %s198, %s199
      %p208 = scmp.eq.s32.totalorder %s20, 0
      %p209 = por %p207, %p208
      %p210 = scmp.ne.s32.totalorder %s198, %s199
      %p211 = scmp.eq.s32.totalorder %s21, 1
      %p212 = por %p210, %p211
      %p214 = scmp.ne.s32.totalorder %s199, %s213
      %p215 = scmp.eq.s32.totalorder %s21, 0
      %p216 = por %p214, %p215
      %s217 = ssub.s32 %s15, %s22
      %p218 = scmp.eq.s32.totalorder %s217, 0
      %s220 = sadd.s32 %s219, 1
      %s221 = scalar_select %p218, %s219, %s220
      %p224 = pneg %p218
      %p225 = scmp.eq.s32.totalorder %s15, 1
      %p226 = por %p224, %p225
      %p227 = scmp.ne.s32.totalorder %s219, %s222
      %p228 = scmp.eq.s32.totalorder %s15, 0
      %p229 = por %p227, %p228
      %p230 = scmp.ne.s32.totalorder %s219, %s222
      %p231 = scmp.eq.s32.totalorder %s20, 1
      %p232 = por %p230, %p231
      %p233 = scmp.ne.s32.totalorder %s222, %s223
      %p234 = scmp.eq.s32.totalorder %s20, 0
      %p235 = por %p233, %p234
      %p236 = scmp.ne.s32.totalorder %s222, %s223
      %p237 = scmp.eq.s32.totalorder %s21, 1
      %p238 = por %p236, %p237
      %p240 = scmp.ne.s32.totalorder %s223, %s239
      %p241 = scmp.eq.s32.totalorder %s21, 0
      %p242 = por %p240, %p241
      %p243 = scmp.le.s32.totalorder 1, %s15
      %p244 = scmp.lt.s32.totalorder %s15, 3
      %p245 = pnand %p243, %p244
      %p246 = pneg %p245
      // Predicated region
      $region9: #{tpu_custom_call.1} parent=5 // pred_check
        _
      $region10: #{tpu_custom_call.1} parent=5 // pred_check_branch
        %248 = sbr.rel (%p245) target = $region12
      $region11: #{tpu_custom_call.1} parent=5 // pred_region
        %s249 = ssub.s32 %s15, 1
        // Predicated region
        $region13: #{tpu_custom_call.1} parent=11 // pred_check
          %p250 = pneg %p62
        $region14: #{tpu_custom_call.1} parent=11 // pred_check_branch
          %252 = sbr.rel (%p250) target = $region16
        $region15: #{tpu_custom_call.1} parent=11 // pred_region
          _
        $region16: #{tpu_custom_call.1} parent=11 // pred_fallthru
          _
        // Predicated region
        $region17: #{tpu_custom_call.1} parent=11 // pred_check
          %p253 = pneg %p83
        $region18: #{tpu_custom_call.1} parent=11 // pred_check_branch
          %255 = sbr.rel (%p253) target = $region20
        $region19: #{tpu_custom_call.1} parent=11 // pred_region
          _
        $region20: #{tpu_custom_call.1} parent=11 // pred_fallthru
          _
        // Predicated region
        $region21: #{tpu_custom_call.1} parent=11 // pred_check
          %p256 = pneg %p104
        $region22: #{tpu_custom_call.1} parent=11 // pred_check_branch
          %258 = sbr.rel (%p256) target = $region24
        $region23: #{tpu_custom_call.1} parent=11 // pred_region
          _
        $region24: #{tpu_custom_call.1} parent=11 // pred_fallthru
          _
        // Predicated region
        $region25: #{tpu_custom_call.1} parent=11 // pred_check
          %p259 = pneg %p125
        $region26: #{tpu_custom_call.1} parent=11 // pred_check_branch
          %261 = sbr.rel (%p259) target = $region28
        $region27: #{tpu_custom_call.1} parent=11 // pred_region
          _
        $region28: #{tpu_custom_call.1} parent=11 // pred_fallthru
          _
        // Predicated region
        $region29: #{tpu_custom_call.1} parent=11 // pred_check
          %p262 = pneg %p146
        $region30: #{tpu_custom_call.1} parent=11 // pred_check_branch
          %264 = sbr.rel (%p262) target = $region32
        $region31: #{tpu_custom_call.1} parent=11 // pred_region
          _
        $region32: #{tpu_custom_call.1} parent=11 // pred_fallthru
          _
        // Predicated region
        $region33: #{tpu_custom_call.1} parent=11 // pred_check
          %p265 = pneg %p167
        $region34: #{tpu_custom_call.1} parent=11 // pred_check_branch
          %267 = sbr.rel (%p265) target = $region36
        $region35: #{tpu_custom_call.1} parent=11 // pred_region
          _
        $region36: #{tpu_custom_call.1} parent=11 // pred_fallthru
          _
        // Predicated region
        $region37: #{tpu_custom_call.1} parent=11 // pred_check
          %p268 = pneg %p188
        $region38: #{tpu_custom_call.1} parent=11 // pred_check_branch
          %270 = sbr.rel (%p268) target = $region40
        $region39: #{tpu_custom_call.1} parent=11 // pred_region
          _
        $region40: #{tpu_custom_call.1} parent=11 // pred_fallthru
          _
        // Predicated region
        $region41: #{tpu_custom_call.1} parent=11 // pred_check
          %p271 = pneg %p209
        $region42: #{tpu_custom_call.1} parent=11 // pred_check_branch
          %273 = sbr.rel (%p271) target = $region44
        $region43: #{tpu_custom_call.1} parent=11 // pred_region
          _
        $region44: #{tpu_custom_call.1} parent=11 // pred_fallthru
          _
      $region12: #{tpu_custom_call.1} parent=5 // pred_fallthru
        _
      %p274 = scmp.lt.s32.totalorder %s15, 2
      // Predicated region
      $region45: #{tpu_custom_call.1} parent=5 // pred_check
        %p275 = pneg %p274
      $region46: #{tpu_custom_call.1} parent=5 // pred_check_branch
        %277 = sbr.rel (%p275) target = $region48
      $region47: #{tpu_custom_call.1} parent=5 // pred_region
        // Predicated region
        $region49: #{tpu_custom_call.1} parent=47 // pred_check
          %p278 = pneg %p35
        $region50: #{tpu_custom_call.1} parent=47 // pred_check_branch
          %280 = sbr.rel (%p278) target = $region52
        $region51: #{tpu_custom_call.1} parent=47 // pred_region
          %s281 = smul.u32 32, %s15
          %s282 = ssub.s32 38, %s281
          %p283 = scmp.lt.s32.totalorder %s282, 32
          %s284 = scalar_select %p283, %s282, 32
          %s285 = smul.u32 8, %s284
          %p286 = scmp.lt.s32.totalorder %s281, 37
          %s287 = scalar_select %p286, %s281, 37
          %s288 = smul.addr %s287, 8
          %s289 = scalar_lea.vmem %s0, %s288
          %s290 = smul.u32 32, %s15
          %s291 = ssub.s32 38, %s290
          %p292 = scmp.lt.s32.totalorder %s291, 32
          %s293 = scalar_select %p292, %s291, 32
          %s294 = smul.u32 8, %s293
        $region52: #{tpu_custom_call.1} parent=47 // pred_fallthru
          _
      $region48: #{tpu_custom_call.1} parent=5 // pred_fallthru
        _
      %p295 = scmp.le.s32.totalorder 1, %s15
      %p296 = scmp.lt.s32.totalorder %s15, 3
      %p297 = pnand %p295, %p296
      %p298 = pneg %p297
      // Predicated region
      $region53: #{tpu_custom_call.1} parent=5 // pred_check
        _
      $region54: #{tpu_custom_call.1} parent=5 // pred_check_branch
        %300 = sbr.rel (%p297) target = $region56
      $region55: #{tpu_custom_call.1} parent=5 // pred_region
        %s301 = ssub.s32 %s15, 1
        %s302 = smul.u32 32, %s20
        %s303 = ssub.s32 38, %s302
        %p304 = scmp.lt.s32.totalorder %s303, 32
        %s305 = scalar_select %p304, %s303, 32
        %s306 = smul.u32 8, %s305
        %p307 = scmp.lt.s32.totalorder %s302, 37
        %s308 = scalar_select %p307, %s302, 37
        %s309 = smul.addr %s308, 8
        %s310 = scalar_lea.vmem %s0, %s309
        %p311 = pneg %p41
        %p312 = pneg %p38
        %p313 = pneg %p62
        %p314 = pneg %p59
        %p315 = pneg %p83
        %p316 = pneg %p80
        %p317 = pneg %p104
        %p318 = pneg %p101
        %p319 = pneg %p125
        %p320 = pneg %p122
        %p321 = pneg %p146
        %p322 = pneg %p143
        %p323 = pneg %p167
        %p324 = pneg %p164
        %p325 = pneg %p188
        %p326 = pneg %p185
        %p327 = pneg %p209
        %p328 = pneg %p206
        %p329 = pneg %p235
        %p330 = pneg %p232
        %s331 = sand.u32 %s222, 1
        %s332 = sand.u32 %s222, 1
        %s333 = smul.addr %s332, 256
        %s334 = scalar_lea.vmem [#allocation2], %s333
        %s335 = smul.u32 32, %s20
        %s336 = ssub.s32 38, %s335
        %p337 = scmp.lt.s32.totalorder %s336, 32
        %s338 = scalar_select %p337, %s336, 32
        %s339 = smul.u32 8, %s338
        %p340 = scmp.lt.s32.totalorder %s335, 37
        %s341 = scalar_select %p340, %s335, 37
        %s342 = smul.addr %s341, 8
        %s343 = scalar_lea.vmem %s0, %s342
        %s344 = smul.u32 32, %s20
        %s345 = ssub.s32 38, %s344
        %p346 = scmp.lt.s32.totalorder %s345, 32
        %s347 = scalar_select %p346, %s345, 32
        %s348 = smul.u32 8, %s347
        %s349 = smul.u32 32, %s20
        %s350 = ssub.s32 38, %s349
        %p351 = scmp.lt.s32.totalorder %s350, 32
        %s352 = scalar_select %p351, %s350, 32
        %s353 = smul.u32 8, %s352
        %v354 = vld [vmem:[%s343] sm:$0xff]
        %v355 = vld [vmem:[%s343 + $0x8] sm:$0xff]
        %v356 = vld [vmem:[%s343 + $0x10] sm:$0xff]
        %v357 = vld [vmem:[%s343 + $0x18] sm:$0xff]
        %v358 = vld [vmem:[%s343 + $0x20] sm:$0xff]
        %v359 = vld [vmem:[%s343 + $0x28] sm:$0xff]
        %v360 = vld [vmem:[%s343 + $0x30] sm:$0xff]
        %v361 = vld [vmem:[%s343 + $0x38] sm:$0xff]
        %v362 = vld [vmem:[%s343 + $0x40] sm:$0xff]
        %v363 = vld [vmem:[%s343 + $0x48] sm:$0xff]
        %v364 = vld [vmem:[%s343 + $0x50] sm:$0xff]
        %v365 = vld [vmem:[%s343 + $0x58] sm:$0xff]
        %v366 = vld [vmem:[%s343 + $0x60] sm:$0xff]
        %v367 = vld [vmem:[%s343 + $0x68] sm:$0xff]
        %v368 = vld [vmem:[%s343 + $0x70] sm:$0xff]
        %v369 = vld [vmem:[%s343 + $0x78] sm:$0xff]
        %v370 = vld [vmem:[%s343 + $0x80] sm:$0xff]
        %v371 = vld [vmem:[%s343 + $0x88] sm:$0xff]
        %v372 = vld [vmem:[%s343 + $0x90] sm:$0xff]
        %v373 = vld [vmem:[%s343 + $0x98] sm:$0xff]
        %v374 = vld [vmem:[%s343 + $0xa0] sm:$0xff]
        %v375 = vld [vmem:[%s343 + $0xa8] sm:$0xff]
        %v376 = vld [vmem:[%s343 + $0xb0] sm:$0xff]
        %v377 = vld [vmem:[%s343 + $0xb8] sm:$0xff]
        %v378 = vld [vmem:[%s343 + $0xc0] sm:$0xff]
        %v379 = vld [vmem:[%s343 + $0xc8] sm:$0xff]
        %v380 = vld [vmem:[%s343 + $0xd0] sm:$0xff]
        %v381 = vld [vmem:[%s343 + $0xd8] sm:$0xff]
        %v382 = vld [vmem:[%s343 + $0xe0] sm:$0xff]
        %v383 = vld [vmem:[%s343 + $0xe8] sm:$0xff]
        %v384 = vld [vmem:[%s343 + $0xf0] sm:$0xff]
        %v385 = vld [vmem:[%s343 + $0xf8] sm:$0xff]
        %v386 = vld [vmem:[%s1] sm:$0xff]
        %v387 = vld [vmem:[%s1 + $0x8] sm:$0xf]
        %v388 = vld [vmem:[%s2] sm:$0xff]
        %v389 = vld [vmem:[%s2 + $0x8] sm:$0xf]
        %391 = vset.pattern.permute.xlu0 0
        %392 = vperm.xlu0 %391, %v388
        %v393 = vpop.permute.xlu0 %392
        %396 = vset.pattern.permute.xlu0 0
        %397 = vperm.xlu0 %396, %v389
        %v398 = vpop.permute.xlu0 %397
        %vm400 = vcmask 261120
        %v402 = vsel %vm400, %v386, 0
        %v405 = vsel %vm400, %v387, 0
        %v408 = vsel %vm400, %v354, 0
        %v411 = vsel %vm400, %v355, 0
        %v414 = vsel %vm400, %v356, 0
        %v417 = vsel %vm400, %v357, 0
        %v420 = vsel %vm400, %v358, 0
        %v423 = vsel %vm400, %v359, 0
        %v426 = vsel %vm400, %v360, 0
        %v429 = vsel %vm400, %v361, 0
        %v432 = vsel %vm400, %v362, 0
        %v435 = vsel %vm400, %v363, 0
        %v438 = vsel %vm400, %v364, 0
        %v441 = vsel %vm400, %v365, 0
        %v444 = vsel %vm400, %v366, 0
        %v447 = vsel %vm400, %v367, 0
        %v450 = vsel %vm400, %v368, 0
        %v453 = vsel %vm400, %v369, 0
        %v456 = vsel %vm400, %v370, 0
        %v459 = vsel %vm400, %v371, 0
        %v462 = vsel %vm400, %v372, 0
        %v465 = vsel %vm400, %v373, 0
        %v468 = vsel %vm400, %v374, 0
        %v471 = vsel %vm400, %v375, 0
        %v474 = vsel %vm400, %v376, 0
        %v477 = vsel %vm400, %v377, 0
        %v480 = vsel %vm400, %v378, 0
        %v483 = vsel %vm400, %v379, 0
        %v486 = vsel %vm400, %v380, 0
        %v489 = vsel %vm400, %v381, 0
        %v492 = vsel %vm400, %v382, 0
        %v495 = vsel %vm400, %v383, 0
        %v498 = vsel %vm400, %v384, 0
        %v501 = vsel %vm400, %v385, 0
        %503 = vmatpush.xpose.msra.mxu0 %v453
        %504 = vmatpush.xpose.msra.mxu0 %v450
        %505 = vmatpush.xpose.msra.mxu0 %v447
        %506 = vmatpush.xpose.msra.mxu0 %v444
        %507 = vmatpush.xpose.msra.mxu0 %v441
        %508 = vmatpush.xpose.msra.mxu0 %v438
        %509 = vmatpush.xpose.msra.mxu0 %v435
        %510 = vmatpush.xpose.msra.mxu0 %v432
        %511 = vmatpush.xpose.msra.mxu0 %v429
        %512 = vmatpush.xpose.msra.mxu0 %v426
        %513 = vmatpush.xpose.msra.mxu0 %v423
        %514 = vmatpush.xpose.msra.mxu0 %v420
        %515 = vmatpush.xpose.msra.mxu0 %v417
        %516 = vmatpush.xpose.msra.mxu0 %v414
        %517 = vmatpush.xpose.msra.mxu0 %v411
        %518 = vmatpush.xpose.msra.mxu0 %v408
        %519 = vmatmul.f32.gmra.mxu0 %v402
        %v520 = vpop.f32.mrf.mxu0
        %v521 = vadd.f32 %v393, %v520
        %522 = vmatmul.f32.gmra.mxu0 %v405
        %v523 = vpop.f32.mrf.mxu0
        %v524 = vadd.f32 %v398, %v523
        %525 = vdwg.mxu0
        %526 = vmatpush.xpose.msra.mxu0 %v501
        %527 = vmatpush.xpose.msra.mxu0 %v498
        %528 = vmatpush.xpose.msra.mxu0 %v495
        %529 = vmatpush.xpose.msra.mxu0 %v492
        %530 = vmatpush.xpose.msra.mxu0 %v489
        %531 = vmatpush.xpose.msra.mxu0 %v486
        %532 = vmatpush.xpose.msra.mxu0 %v483
        %533 = vmatpush.xpose.msra.mxu0 %v480
        %534 = vmatpush.xpose.msra.mxu0 %v477
        %535 = vmatpush.xpose.msra.mxu0 %v474
        %536 = vmatpush.xpose.msra.mxu0 %v471
        %537 = vmatpush.xpose.msra.mxu0 %v468
        %538 = vmatpush.xpose.msra.mxu0 %v465
        %539 = vmatpush.xpose.msra.mxu0 %v462
        %540 = vmatpush.xpose.msra.mxu0 %v459
        %541 = vmatpush.xpose.msra.mxu0 %v456
        %542 = vmatmul.f32.gmra.mxu0 %v402
        %v543 = vpop.f32.mrf.mxu0
        %v544 = vadd.f32 %v393, %v543
        %545 = vmatmul.f32.gmra.mxu0 %v405
        %v546 = vpop.f32.mrf.mxu0
        %v547 = vadd.f32 %v398, %v546
        %548 = vdwg.mxu0
        %v549 = vmax.f32 %v521, 0.0
        %v550 = vmax.f32 %v544, 0.0
        %v551 = vmax.f32 %v524, 0.0
        %v552 = vmax.f32 %v547, 0.0
        %v553 = vld [vmem:[%s3] sm:$0xff]
        %v554 = vld [vmem:[%s4] sm:$0xff]
        %556 = vset.pattern.permute.xlu0 0
        %557 = vperm.xlu0 %556, %v554
        %v558 = vpop.permute.xlu0 %557
        %vm560 = vcmask 97280
        %v562 = vsel %vm560, %v553, 0
        %vm564 = vcmask 1043456
        %v566 = vsel %vm564, %v551, 0
        %v569 = vsel %vm564, %v552, 0
        %571 = vmatpush.msra.mxu0 0.0
        %572 = vmatpush.msra.mxu0 0.0
        %573 = vmatpush.msra.mxu0 0.0
        %574 = vmatpush.msra.mxu0 0.0
        %575 = vmatpush.msra.mxu0 0.0
        %576 = vmatpush.msra.mxu0 0.0
        %577 = vmatpush.msra.mxu0 0.0
        %578 = vmatpush.msra.mxu0 0.0
        %579 = vmatpush.msra.mxu0 0.0
        %580 = vmatpush.msra.mxu0 0.0
        %581 = vmatpush.msra.mxu0 0.0
        %582 = vmatpush.msra.mxu0 0.0
        %583 = vmatpush.msra.mxu0 0.0
        %584 = vmatpush.msra.mxu0 0.0
        %585 = vmatpush.msra.mxu0 %v566
        %586 = vmatpush.msra.mxu0 %v549
        %587 = vmatmul.f32.gmra.mxu0 %v562
        %v588 = vpop.f32.mrf.mxu0
        %v589 = vadd.f32 %v558, %v588
        %590 = vdwg.mxu0
        %591 = vmatpush.msra.mxu0 0.0
        %592 = vmatpush.msra.mxu0 0.0
        %593 = vmatpush.msra.mxu0 0.0
        %594 = vmatpush.msra.mxu0 0.0
        %595 = vmatpush.msra.mxu0 0.0
        %596 = vmatpush.msra.mxu0 0.0
        %597 = vmatpush.msra.mxu0 0.0
        %598 = vmatpush.msra.mxu0 0.0
        %599 = vmatpush.msra.mxu0 0.0
        %600 = vmatpush.msra.mxu0 0.0
        %601 = vmatpush.msra.mxu0 0.0
        %602 = vmatpush.msra.mxu0 0.0
        %603 = vmatpush.msra.mxu0 0.0
        %604 = vmatpush.msra.mxu0 0.0
        %605 = vmatpush.msra.mxu0 %v569
        %606 = vmatpush.msra.mxu0 %v550
        %607 = vmatmul.f32.gmra.mxu0 %v562
        %v608 = vpop.f32.mrf.mxu0
        %v609 = vadd.f32 %v558, %v608
        %610 = vdwg.mxu0
        %v611 = vld [vmem:[%s5] sm:$0xff]
        %v612 = vld [vmem:[%s5 + $0x8] sm:$0xf]
        %v613 = vld [vmem:[%s6] sm:$0xff]
        %v614 = vld [vmem:[%s6 + $0x8] sm:$0xf]
        %616 = vset.pattern.permute.xlu0 0
        %617 = vperm.xlu0 %616, %v613
        %v618 = vpop.permute.xlu0 %617
        %621 = vset.pattern.permute.xlu0 0
        %622 = vperm.xlu0 %621, %v614
        %v623 = vpop.permute.xlu0 %622
        %vm625 = vcmask 64512
        %v627 = vsel %vm625, %v611, 0
        %v630 = vsel %vm625, %v612, 0
        %632 = vmatpush.msra.mxu0 0.0
        %633 = vmatpush.msra.mxu0 0.0
        %634 = vmatpush.msra.mxu0 0.0
        %635 = vmatpush.msra.mxu0 0.0
        %636 = vmatpush.msra.mxu0 0.0
        %637 = vmatpush.msra.mxu0 0.0
        %638 = vmatpush.msra.mxu0 0.0
        %639 = vmatpush.msra.mxu0 0.0
        %640 = vmatpush.msra.mxu0 0.0
        %641 = vmatpush.msra.mxu0 0.0
        %642 = vmatpush.msra.mxu0 0.0
        %643 = vmatpush.msra.mxu0 0.0
        %644 = vmatpush.msra.mxu0 0.0
        %645 = vmatpush.msra.mxu0 0.0
        %646 = vmatpush.msra.mxu0 0.0
        %647 = vmatpush.msra.mxu0 %v589
        %648 = vmatmul.f32.gmra.mxu0 %v627
        %v649 = vpop.f32.mrf.mxu0
        %v650 = vadd.f32 %v618, %v649
        %651 = vmatmul.f32.gmra.mxu0 %v630
        %v652 = vpop.f32.mrf.mxu0
        %v653 = vadd.f32 %v623, %v652
        %654 = vdwg.mxu0
        %655 = vmatpush.msra.mxu0 0.0
        %656 = vmatpush.msra.mxu0 0.0
        %657 = vmatpush.msra.mxu0 0.0
        %658 = vmatpush.msra.mxu0 0.0
        %659 = vmatpush.msra.mxu0 0.0
        %660 = vmatpush.msra.mxu0 0.0
        %661 = vmatpush.msra.mxu0 0.0
        %662 = vmatpush.msra.mxu0 0.0
        %663 = vmatpush.msra.mxu0 0.0
        %664 = vmatpush.msra.mxu0 0.0
        %665 = vmatpush.msra.mxu0 0.0
        %666 = vmatpush.msra.mxu0 0.0
        %667 = vmatpush.msra.mxu0 0.0
        %668 = vmatpush.msra.mxu0 0.0
        %669 = vmatpush.msra.mxu0 0.0
        %670 = vmatpush.msra.mxu0 %v609
        %671 = vmatmul.f32.gmra.mxu0 %v627
        %v672 = vpop.f32.mrf.mxu0
        %v673 = vadd.f32 %v618, %v672
        %674 = vmatmul.f32.gmra.mxu0 %v630
        %v675 = vpop.f32.mrf.mxu0
        %v676 = vadd.f32 %v623, %v675
        %677 = vdwg.mxu0
        %v678 = vmax.f32 %v650, 0.0
        %v679 = vmax.f32 %v673, 0.0
        %v680 = vmax.f32 %v653, 0.0
        %v681 = vmax.f32 %v676, 0.0
        %v682 = vld [vmem:[%s7] sm:$0xff]
        %v683 = vld [vmem:[%s7 + $0x8] sm:$0xff]
        %v684 = vld [vmem:[%s7 + $0x10] sm:$0xff]
        %v685 = vld [vmem:[%s7 + $0x18] sm:$0xff]
        %v686 = vld [vmem:[%s8] sm:$0xff]
        %v687 = vld [vmem:[%s8 + $0x8] sm:$0xff]
        %v688 = vld [vmem:[%s8 + $0x10] sm:$0xff]
        %v689 = vld [vmem:[%s8 + $0x18] sm:$0xff]
        %691 = vset.pattern.permute.xlu0 0
        %692 = vperm.xlu0 %691, %v686
        %v693 = vpop.permute.xlu0 %692
        %696 = vset.pattern.permute.xlu0 0
        %697 = vperm.xlu0 %696, %v687
        %v698 = vpop.permute.xlu0 %697
        %701 = vset.pattern.permute.xlu0 0
        %702 = vperm.xlu0 %701, %v688
        %v703 = vpop.permute.xlu0 %702
        %706 = vset.pattern.permute.xlu0 0
        %707 = vperm.xlu0 %706, %v689
        %v708 = vpop.permute.xlu0 %707
        %v711 = vsel %vm560, %v682, 0
        %v714 = vsel %vm560, %v683, 0
        %v717 = vsel %vm560, %v684, 0
        %v720 = vsel %vm560, %v685, 0
        %v723 = vsel %vm564, %v680, 0
        %v726 = vsel %vm564, %v681, 0
        %728 = vmatpush.msra.mxu0 0.0
        %729 = vmatpush.msra.mxu0 0.0
        %730 = vmatpush.msra.mxu0 0.0
        %731 = vmatpush.msra.mxu0 0.0
        %732 = vmatpush.msra.mxu0 0.0
        %733 = vmatpush.msra.mxu0 0.0
        %734 = vmatpush.msra.mxu0 0.0
        %735 = vmatpush.msra.mxu0 0.0
        %736 = vmatpush.msra.mxu0 0.0
        %737 = vmatpush.msra.mxu0 0.0
        %738 = vmatpush.msra.mxu0 0.0
        %739 = vmatpush.msra.mxu0 0.0
        %740 = vmatpush.msra.mxu0 0.0
        %741 = vmatpush.msra.mxu0 0.0
        %742 = vmatpush.msra.mxu0 %v723
        %743 = vmatpush.msra.mxu0 %v678
        %744 = vmatmul.f32.gmra.mxu0 %v711
        %v745 = vpop.f32.mrf.mxu0
        %v746 = vadd.f32 %v693, %v745
        %747 = vmatmul.f32.gmra.mxu0 %v714
        %v748 = vpop.f32.mrf.mxu0
        %v749 = vadd.f32 %v698, %v748
        %750 = vmatmul.f32.gmra.mxu0 %v717
        %v751 = vpop.f32.mrf.mxu0
        %v752 = vadd.f32 %v703, %v751
        %753 = vmatmul.f32.gmra.mxu0 %v720
        %v754 = vpop.f32.mrf.mxu0
        %v755 = vadd.f32 %v708, %v754
        %756 = vdwg.mxu0
        %757 = vmatpush.msra.mxu0 0.0
        %758 = vmatpush.msra.mxu0 0.0
        %759 = vmatpush.msra.mxu0 0.0
        %760 = vmatpush.msra.mxu0 0.0
        %761 = vmatpush.msra.mxu0 0.0
        %762 = vmatpush.msra.mxu0 0.0
        %763 = vmatpush.msra.mxu0 0.0
        %764 = vmatpush.msra.mxu0 0.0
        %765 = vmatpush.msra.mxu0 0.0
        %766 = vmatpush.msra.mxu0 0.0
        %767 = vmatpush.msra.mxu0 0.0
        %768 = vmatpush.msra.mxu0 0.0
        %769 = vmatpush.msra.mxu0 0.0
        %770 = vmatpush.msra.mxu0 0.0
        %771 = vmatpush.msra.mxu0 %v726
        %772 = vmatpush.msra.mxu0 %v679
        %773 = vmatmul.f32.gmra.mxu0 %v711
        %v774 = vpop.f32.mrf.mxu0
        %v775 = vadd.f32 %v693, %v774
        %776 = vmatmul.f32.gmra.mxu0 %v714
        %v777 = vpop.f32.mrf.mxu0
        %v778 = vadd.f32 %v698, %v777
        %779 = vmatmul.f32.gmra.mxu0 %v717
        %v780 = vpop.f32.mrf.mxu0
        %v781 = vadd.f32 %v703, %v780
        %782 = vmatmul.f32.gmra.mxu0 %v720
        %v783 = vpop.f32.mrf.mxu0
        %v784 = vadd.f32 %v708, %v783
        %785 = vdwg.mxu0
        %v786 = vtanh.pop %v746
        %v787 = vtanh.pop %v775
        %v788 = vtanh.pop %v749
        %v789 = vtanh.pop %v778
        %v790 = vtanh.pop %v752
        %v791 = vtanh.pop %v781
        %v792 = vtanh.pop %v755
        %v793 = vtanh.pop %v784
        %794 = vxpose.xlu0.b32.start [1/16] %v786, 128
        %795 = vxpose.xlu0.b32.cont [2/16] %v788, 128
        %796 = vxpose.xlu0.b32.cont [3/16] %v790, 128
        %797 = vxpose.xlu0.b32.cont [4/16] %v792, 128
        %798 = vxpose.xlu0.b32.cont [5/16] 0.0, 128
        %799 = vxpose.xlu0.b32.cont [6/16] 0.0, 128
        %800 = vxpose.xlu0.b32.cont [7/16] 0.0, 128
        %801 = vxpose.xlu0.b32.cont [8/16] 0.0, 128
        %802 = vxpose.xlu0.b32.cont [9/16] 0.0, 128
        %803 = vxpose.xlu0.b32.cont [10/16] 0.0, 128
        %804 = vxpose.xlu0.b32.cont [11/16] 0.0, 128
        %805 = vxpose.xlu0.b32.cont [12/16] 0.0, 128
        %806 = vxpose.xlu0.b32.cont [13/16] 0.0, 128
        %807 = vxpose.xlu0.b32.cont [14/16] 0.0, 128
        %808 = vxpose.xlu0.b32.cont [15/16] 0.0, 128
        %809 = vxpose.xlu0.b32.end [16/16] 0.0, 128
        %v810 = vpop.trf.xlu0
        %v811 = vpop.trf.xlu0
        %v812 = vpop.trf.xlu0
        %v813 = vpop.trf.xlu0
        %v814 = vpop.trf.xlu0
        %v815 = vpop.trf.xlu0
        %v816 = vpop.trf.xlu0
        %v817 = vpop.trf.xlu0
        %v818 = vpop.trf.xlu0
        %v819 = vpop.trf.xlu0
        %v820 = vpop.trf.xlu0
        %v821 = vpop.trf.xlu0
        %v822 = vpop.trf.xlu0
        %v823 = vpop.trf.xlu0
        %v824 = vpop.trf.xlu0
        %v825 = vpop.trf.xlu0
        %826 = vxpose.xlu0.b32.start [1/16] %v787, 128
        %827 = vxpose.xlu0.b32.cont [2/16] %v789, 128
        %828 = vxpose.xlu0.b32.cont [3/16] %v791, 128
        %829 = vxpose.xlu0.b32.cont [4/16] %v793, 128
        %830 = vxpose.xlu0.b32.cont [5/16] 0.0, 128
        %831 = vxpose.xlu0.b32.cont [6/16] 0.0, 128
        %832 = vxpose.xlu0.b32.cont [7/16] 0.0, 128
        %833 = vxpose.xlu0.b32.cont [8/16] 0.0, 128
        %834 = vxpose.xlu0.b32.cont [9/16] 0.0, 128
        %835 = vxpose.xlu0.b32.cont [10/16] 0.0, 128
        %836 = vxpose.xlu0.b32.cont [11/16] 0.0, 128
        %837 = vxpose.xlu0.b32.cont [12/16] 0.0, 128
        %838 = vxpose.xlu0.b32.cont [13/16] 0.0, 128
        %839 = vxpose.xlu0.b32.cont [14/16] 0.0, 128
        %840 = vxpose.xlu0.b32.cont [15/16] 0.0, 128
        %841 = vxpose.xlu0.b32.end [16/16] 0.0, 128
        %v842 = vpop.trf.xlu0
        %v843 = vpop.trf.xlu0
        %v844 = vpop.trf.xlu0
        %v845 = vpop.trf.xlu0
        %v846 = vpop.trf.xlu0
        %v847 = vpop.trf.xlu0
        %v848 = vpop.trf.xlu0
        %v849 = vpop.trf.xlu0
        %v850 = vpop.trf.xlu0
        %v851 = vpop.trf.xlu0
        %v852 = vpop.trf.xlu0
        %v853 = vpop.trf.xlu0
        %v854 = vpop.trf.xlu0
        %v855 = vpop.trf.xlu0
        %v856 = vpop.trf.xlu0
        %v857 = vpop.trf.xlu0
        %858 = vst.msk [vmem:[%s334] sm:$0xff] %vm400, %v810
        %859 = vst.msk [vmem:[%s334 + $0x8] sm:$0xff] %vm400, %v811
        %860 = vst.msk [vmem:[%s334 + $0x10] sm:$0xff] %vm400, %v812
        %861 = vst.msk [vmem:[%s334 + $0x18] sm:$0xff] %vm400, %v813
        %862 = vst.msk [vmem:[%s334 + $0x20] sm:$0xff] %vm400, %v814
        %863 = vst.msk [vmem:[%s334 + $0x28] sm:$0xff] %vm400, %v815
        %864 = vst.msk [vmem:[%s334 + $0x30] sm:$0xff] %vm400, %v816
        %865 = vst.msk [vmem:[%s334 + $0x38] sm:$0xff] %vm400, %v817
        %866 = vst.msk [vmem:[%s334 + $0x40] sm:$0xff] %vm400, %v818
        %867 = vst.msk [vmem:[%s334 + $0x48] sm:$0xff] %vm400, %v819
        %868 = vst.msk [vmem:[%s334 + $0x50] sm:$0xff] %vm400, %v820
        %869 = vst.msk [vmem:[%s334 + $0x58] sm:$0xff] %vm400, %v821
        %870 = vst.msk [vmem:[%s334 + $0x60] sm:$0xff] %vm400, %v822
        %871 = vst.msk [vmem:[%s334 + $0x68] sm:$0xff] %vm400, %v823
        %872 = vst.msk [vmem:[%s334 + $0x70] sm:$0xff] %vm400, %v824
        %873 = vst.msk [vmem:[%s334 + $0x78] sm:$0xff] %vm400, %v825
        %874 = vst.msk [vmem:[%s334 + $0x80] sm:$0xff] %vm400, %v842
        %875 = vst.msk [vmem:[%s334 + $0x88] sm:$0xff] %vm400, %v843
        %876 = vst.msk [vmem:[%s334 + $0x90] sm:$0xff] %vm400, %v844
        %877 = vst.msk [vmem:[%s334 + $0x98] sm:$0xff] %vm400, %v845
        %878 = vst.msk [vmem:[%s334 + $0xa0] sm:$0xff] %vm400, %v846
        %879 = vst.msk [vmem:[%s334 + $0xa8] sm:$0xff] %vm400, %v847
        %880 = vst.msk [vmem:[%s334 + $0xb0] sm:$0xff] %vm400, %v848
        %881 = vst.msk [vmem:[%s334 + $0xb8] sm:$0xff] %vm400, %v849
        %882 = vst.msk [vmem:[%s334 + $0xc0] sm:$0xff] %vm400, %v850
        %883 = vst.msk [vmem:[%s334 + $0xc8] sm:$0xff] %vm400, %v851
        %884 = vst.msk [vmem:[%s334 + $0xd0] sm:$0xff] %vm400, %v852
        %885 = vst.msk [vmem:[%s334 + $0xd8] sm:$0xff] %vm400, %v853
        %886 = vst.msk [vmem:[%s334 + $0xe0] sm:$0xff] %vm400, %v854
        %887 = vst.msk [vmem:[%s334 + $0xe8] sm:$0xff] %vm400, %v855
        %888 = vst.msk [vmem:[%s334 + $0xf0] sm:$0xff] %vm400, %v856
        %889 = vst.msk [vmem:[%s334 + $0xf8] sm:$0xff] %vm400, %v857
        %s890 = sand.u32 %s222, 1
        %s891 = sand.u32 %s222, 1
        %s892 = smul.addr %s891, 256
        %s893 = scalar_lea.vmem [#allocation2], %s892
        // Predicated region
        $region57: #{tpu_custom_call.1} parent=55 // pred_check
          %p894 = pneg %p232
        $region58: #{tpu_custom_call.1} parent=55 // pred_check_branch
          %896 = sbr.rel (%p894) target = $region60
        $region59: #{tpu_custom_call.1} parent=55 // pred_region
          %s897 = smul.u32 32, %s20
          %s898 = ssub.s32 38, %s897
          %p899 = scmp.lt.s32.totalorder %s898, 32
          %s900 = scalar_select %p899, %s898, 32
          %s901 = smul.u32 8, %s900
          %p902 = scmp.ne.s32.totalorder 0, %s901
          %s903 = smul.addr %s897, 8
          %s904 = scalar_lea.vmem %s9, %s903
          // Predicated region
          $region61: #{tpu_custom_call.1} parent=59 // pred_check
            %p905 = pneg %p902
          $region62: #{tpu_custom_call.1} parent=59 // pred_check_branch
            %907 = sbr.rel (%p905) target = $region64
          $region63: #{tpu_custom_call.1} parent=59 // pred_region
            // Predicated region
            $region65: #{tpu_custom_call.1} parent=63 // pred_check
              _
            $region66: #{tpu_custom_call.1} parent=63 // pred_check_branch
              %909 = sbr.rel (0) target = $region68
            $region67: #{tpu_custom_call.1} parent=63 // pred_region
              // Predicated region
              $region87: #{tpu_custom_call.1} parent=67 // pred_check
                _
              $region88: #{tpu_custom_call.1} parent=67 // pred_check_branch
                %1021 = sbr.rel (0) target = $region90
              $region89: #{tpu_custom_call.1} parent=67 // pred_region
                %s1022 = sshrl.u32 %s900, 5
                // While loop
                $region91: #{tpu_custom_call.1} parent=89 // loop_pre_header
                  _
                $region92: #{tpu_custom_call.1} parent=89 // loop_header
                  %s1024 = sphi 0, %s1026
                  %p1025 = scmp.ge.s32.totalorder %s1024, %s1022
                  %s1029 = sphi 0, %s1098
                  %s1030 = sphi %s893, %s1101
                  %s1031 = sphi %s904, %s1102
                $region93: #{tpu_custom_call.1} parent=89 // loop_header_branch
                  %1028 = sbr.rel (%p1025) target = $region97
                $region94: #{tpu_custom_call.1} parent=89 // loop_body
                  %v1032 = vld [vmem:[%s1030] sm:$0xff]
                  %1033 = vst [vmem:[%s1031] sm:$0xff] %v1032
                  %v1034 = vld [vmem:[%s1030 + $0x8] sm:$0xff]
                  %1035 = vst [vmem:[%s1031 + $0x8] sm:$0xff] %v1034
                  %v1036 = vld [vmem:[%s1030 + $0x10] sm:$0xff]
                  %1037 = vst [vmem:[%s1031 + $0x10] sm:$0xff] %v1036
                  %v1038 = vld [vmem:[%s1030 + $0x18] sm:$0xff]
                  %1039 = vst [vmem:[%s1031 + $0x18] sm:$0xff] %v1038
                  %v1040 = vld [vmem:[%s1030 + $0x20] sm:$0xff]
                  %1041 = vst [vmem:[%s1031 + $0x20] sm:$0xff] %v1040
                  %v1042 = vld [vmem:[%s1030 + $0x28] sm:$0xff]
                  %1043 = vst [vmem:[%s1031 + $0x28] sm:$0xff] %v1042
                  %v1044 = vld [vmem:[%s1030 + $0x30] sm:$0xff]
                  %1045 = vst [vmem:[%s1031 + $0x30] sm:$0xff] %v1044
                  %v1046 = vld [vmem:[%s1030 + $0x38] sm:$0xff]
                  %1047 = vst [vmem:[%s1031 + $0x38] sm:$0xff] %v1046
                  %v1048 = vld [vmem:[%s1030 + $0x40] sm:$0xff]
                  %1049 = vst [vmem:[%s1031 + $0x40] sm:$0xff] %v1048
                  %v1050 = vld [vmem:[%s1030 + $0x48] sm:$0xff]
                  %1051 = vst [vmem:[%s1031 + $0x48] sm:$0xff] %v1050
                  %v1052 = vld [vmem:[%s1030 + $0x50] sm:$0xff]
                  %1053 = vst [vmem:[%s1031 + $0x50] sm:$0xff] %v1052
                  %v1054 = vld [vmem:[%s1030 + $0x58] sm:$0xff]
                  %1055 = vst [vmem:[%s1031 + $0x58] sm:$0xff] %v1054
                  %v1056 = vld [vmem:[%s1030 + $0x60] sm:$0xff]
                  %1057 = vst [vmem:[%s1031 + $0x60] sm:$0xff] %v1056
                  %v1058 = vld [vmem:[%s1030 + $0x68] sm:$0xff]
                  %1059 = vst [vmem:[%s1031 + $0x68] sm:$0xff] %v1058
                  %v1060 = vld [vmem:[%s1030 + $0x70] sm:$0xff]
                  %1061 = vst [vmem:[%s1031 + $0x70] sm:$0xff] %v1060
                  %v1062 = vld [vmem:[%s1030 + $0x78] sm:$0xff]
                  %1063 = vst [vmem:[%s1031 + $0x78] sm:$0xff] %v1062
                  %v1064 = vld [vmem:[%s1030 + $0x80] sm:$0xff]
                  %1065 = vst [vmem:[%s1031 + $0x80] sm:$0xff] %v1064
                  %v1066 = vld [vmem:[%s1030 + $0x88] sm:$0xff]
                  %1067 = vst [vmem:[%s1031 + $0x88] sm:$0xff] %v1066
                  %v1068 = vld [vmem:[%s1030 + $0x90] sm:$0xff]
                  %1069 = vst [vmem:[%s1031 + $0x90] sm:$0xff] %v1068
                  %v1070 = vld [vmem:[%s1030 + $0x98] sm:$0xff]
                  %1071 = vst [vmem:[%s1031 + $0x98] sm:$0xff] %v1070
                  %v1072 = vld [vmem:[%s1030 + $0xa0] sm:$0xff]
                  %1073 = vst [vmem:[%s1031 + $0xa0] sm:$0xff] %v1072
                  %v1074 = vld [vmem:[%s1030 + $0xa8] sm:$0xff]
                  %1075 = vst [vmem:[%s1031 + $0xa8] sm:$0xff] %v1074
                  %v1076 = vld [vmem:[%s1030 + $0xb0] sm:$0xff]
                  %1077 = vst [vmem:[%s1031 + $0xb0] sm:$0xff] %v1076
                  %v1078 = vld [vmem:[%s1030 + $0xb8] sm:$0xff]
                  %1079 = vst [vmem:[%s1031 + $0xb8] sm:$0xff] %v1078
                  %v1080 = vld [vmem:[%s1030 + $0xc0] sm:$0xff]
                  %1081 = vst [vmem:[%s1031 + $0xc0] sm:$0xff] %v1080
                  %v1082 = vld [vmem:[%s1030 + $0xc8] sm:$0xff]
                  %1083 = vst [vmem:[%s1031 + $0xc8] sm:$0xff] %v1082
                  %v1084 = vld [vmem:[%s1030 + $0xd0] sm:$0xff]
                  %1085 = vst [vmem:[%s1031 + $0xd0] sm:$0xff] %v1084
                  %v1086 = vld [vmem:[%s1030 + $0xd8] sm:$0xff]
                  %1087 = vst [vmem:[%s1031 + $0xd8] sm:$0xff] %v1086
                  %v1088 = vld [vmem:[%s1030 + $0xe0] sm:$0xff]
                  %1089 = vst [vmem:[%s1031 + $0xe0] sm:$0xff] %v1088
                  %v1090 = vld [vmem:[%s1030 + $0xe8] sm:$0xff]
                  %1091 = vst [vmem:[%s1031 + $0xe8] sm:$0xff] %v1090
                  %v1092 = vld [vmem:[%s1030 + $0xf0] sm:$0xff]
                  %1093 = vst [vmem:[%s1031 + $0xf0] sm:$0xff] %v1092
                  %v1094 = vld [vmem:[%s1030 + $0xf8] sm:$0xff]
                  %1095 = vst [vmem:[%s1031 + $0xf8] sm:$0xff] %v1094
                  %s1096 = sadd.s32 1, %s1029
                  %p1097 = scmp.ge.s32.totalorder %s1096, %s1022
                  %s1098 = scalar_select %p1097, 0, %s1096
                  %s1099 = smul.u32 %s1098, 256
                  %s1100 = smul.u32 %s1098, 256
                  %s1101 = scalar_lea.vmem %s893, %s1099 [#allocation2]
                  %s1102 = scalar_lea.vmem %s904, %s1100
                $region95: #{tpu_custom_call.1} parent=89 // loop_footer
                  %s1026 = sadd.s32 %s1024, 1
                $region96: #{tpu_custom_call.1} parent=89 // loop_footer_branch
                  %1023 = sbr.rel target = $region92
                $region97: #{tpu_custom_call.1} parent=89 // loop_exit
                  _
                %s1103 = sshrl.u32 %s900, 5
                %s1104 = sand.u32 %s900, 31
                %s1105 = smul.u32 %s1103, 32
                %s1106 = smul.u32 8, %s1105
                %s1107 = scalar_lea.vmem %s893, %s1106 [#allocation2]
                %s1108 = smul.u32 8, %s1105
                %s1109 = scalar_lea.vmem %s904, %s1108
                // While loop
                $region98: #{tpu_custom_call.1} parent=89 // loop_pre_header
                  _
                $region99: #{tpu_custom_call.1} parent=89 // loop_header
                  %s1111 = sphi 0, %s1113
                  %p1112 = scmp.ge.s32.totalorder %s1111, %s1104
                  %s1116 = sphi 0, %s1123
                  %s1117 = sphi %s1107, %s1126
                  %s1118 = sphi %s1109, %s1127
                $region100: #{tpu_custom_call.1} parent=89 // loop_header_branch
                  %1115 = sbr.rel (%p1112) target = $region104
                $region101: #{tpu_custom_call.1} parent=89 // loop_body
                  %v1119 = vld [vmem:[%s1117] sm:$0xff]
                  %1120 = vst [vmem:[%s1118] sm:$0xff] %v1119
                  %s1121 = sadd.s32 1, %s1116
                  %p1122 = scmp.ge.s32.totalorder %s1121, %s1104
                  %s1123 = scalar_select %p1122, 0, %s1121
                  %s1124 = smul.u32 %s1123, 8
                  %s1125 = smul.u32 %s1123, 8
                  %s1126 = scalar_lea.vmem %s1107, %s1124 [#allocation2]
                  %s1127 = scalar_lea.vmem %s1109, %s1125
                $region102: #{tpu_custom_call.1} parent=89 // loop_footer
                  %s1113 = sadd.s32 %s1111, 1
                $region103: #{tpu_custom_call.1} parent=89 // loop_footer_branch
                  %1110 = sbr.rel target = $region99
                $region104: #{tpu_custom_call.1} parent=89 // loop_exit
                  _
              $region90: #{tpu_custom_call.1} parent=67 // pred_fallthru
                _
              // Predicated region
              $region105: #{tpu_custom_call.1} parent=67 // pred_check
                _
              $region106: #{tpu_custom_call.1} parent=67 // pred_check_branch
                %1129 = sbr.rel target = $region108
              $region107: #{tpu_custom_call.1} parent=67 // pred_region
                _
              $region108: #{tpu_custom_call.1} parent=67 // pred_fallthru
                _
            $region68: #{tpu_custom_call.1} parent=63 // pred_fallthru
              _
            // Predicated region
            $region69: #{tpu_custom_call.1} parent=63 // pred_check
              _
            $region70: #{tpu_custom_call.1} parent=63 // pred_check_branch
              %911 = sbr.rel target = $region72
            $region71: #{tpu_custom_call.1} parent=63 // pred_region
              %s913 = ssub.s32 256, 1
              %s914 = sshrl.u32 %s900, 5
              // While loop
              $region73: #{tpu_custom_call.1} parent=71 // loop_pre_header
                _
              $region74: #{tpu_custom_call.1} parent=71 // loop_header
                %s916 = sphi 0, %s918
                %p917 = scmp.ge.s32.totalorder %s916, %s914
                %s921 = sphi 0, %s990
                %s922 = sphi %s893, %s993
                %s923 = sphi %s904, %s994
              $region75: #{tpu_custom_call.1} parent=71 // loop_header_branch
                %920 = sbr.rel (%p917) target = $region79
              $region76: #{tpu_custom_call.1} parent=71 // loop_body
                %v924 = vld [vmem:[%s922] sm:%s913]
                %925 = vst [vmem:[%s923] sm:%s913] %v924
                %v926 = vld [vmem:[%s922 + $0x8] sm:%s913]
                %927 = vst [vmem:[%s923 + $0x8] sm:%s913] %v926
                %v928 = vld [vmem:[%s922 + $0x10] sm:%s913]
                %929 = vst [vmem:[%s923 + $0x10] sm:%s913] %v928
                %v930 = vld [vmem:[%s922 + $0x18] sm:%s913]
                %931 = vst [vmem:[%s923 + $0x18] sm:%s913] %v930
                %v932 = vld [vmem:[%s922 + $0x20] sm:%s913]
                %933 = vst [vmem:[%s923 + $0x20] sm:%s913] %v932
                %v934 = vld [vmem:[%s922 + $0x28] sm:%s913]
                %935 = vst [vmem:[%s923 + $0x28] sm:%s913] %v934
                %v936 = vld [vmem:[%s922 + $0x30] sm:%s913]
                %937 = vst [vmem:[%s923 + $0x30] sm:%s913] %v936
                %v938 = vld [vmem:[%s922 + $0x38] sm:%s913]
                %939 = vst [vmem:[%s923 + $0x38] sm:%s913] %v938
                %v940 = vld [vmem:[%s922 + $0x40] sm:%s913]
                %941 = vst [vmem:[%s923 + $0x40] sm:%s913] %v940
                %v942 = vld [vmem:[%s922 + $0x48] sm:%s913]
                %943 = vst [vmem:[%s923 + $0x48] sm:%s913] %v942
                %v944 = vld [vmem:[%s922 + $0x50] sm:%s913]
                %945 = vst [vmem:[%s923 + $0x50] sm:%s913] %v944
                %v946 = vld [vmem:[%s922 + $0x58] sm:%s913]
                %947 = vst [vmem:[%s923 + $0x58] sm:%s913] %v946
                %v948 = vld [vmem:[%s922 + $0x60] sm:%s913]
                %949 = vst [vmem:[%s923 + $0x60] sm:%s913] %v948
                %v950 = vld [vmem:[%s922 + $0x68] sm:%s913]
                %951 = vst [vmem:[%s923 + $0x68] sm:%s913] %v950
                %v952 = vld [vmem:[%s922 + $0x70] sm:%s913]
                %953 = vst [vmem:[%s923 + $0x70] sm:%s913] %v952
                %v954 = vld [vmem:[%s922 + $0x78] sm:%s913]
                %955 = vst [vmem:[%s923 + $0x78] sm:%s913] %v954
                %v956 = vld [vmem:[%s922 + $0x80] sm:%s913]
                %957 = vst [vmem:[%s923 + $0x80] sm:%s913] %v956
                %v958 = vld [vmem:[%s922 + $0x88] sm:%s913]
                %959 = vst [vmem:[%s923 + $0x88] sm:%s913] %v958
                %v960 = vld [vmem:[%s922 + $0x90] sm:%s913]
                %961 = vst [vmem:[%s923 + $0x90] sm:%s913] %v960
                %v962 = vld [vmem:[%s922 + $0x98] sm:%s913]
                %963 = vst [vmem:[%s923 + $0x98] sm:%s913] %v962
                %v964 = vld [vmem:[%s922 + $0xa0] sm:%s913]
                %965 = vst [vmem:[%s923 + $0xa0] sm:%s913] %v964
                %v966 = vld [vmem:[%s922 + $0xa8] sm:%s913]
                %967 = vst [vmem:[%s923 + $0xa8] sm:%s913] %v966
                %v968 = vld [vmem:[%s922 + $0xb0] sm:%s913]
                %969 = vst [vmem:[%s923 + $0xb0] sm:%s913] %v968
                %v970 = vld [vmem:[%s922 + $0xb8] sm:%s913]
                %971 = vst [vmem:[%s923 + $0xb8] sm:%s913] %v970
                %v972 = vld [vmem:[%s922 + $0xc0] sm:%s913]
                %973 = vst [vmem:[%s923 + $0xc0] sm:%s913] %v972
                %v974 = vld [vmem:[%s922 + $0xc8] sm:%s913]
                %975 = vst [vmem:[%s923 + $0xc8] sm:%s913] %v974
                %v976 = vld [vmem:[%s922 + $0xd0] sm:%s913]
                %977 = vst [vmem:[%s923 + $0xd0] sm:%s913] %v976
                %v978 = vld [vmem:[%s922 + $0xd8] sm:%s913]
                %979 = vst [vmem:[%s923 + $0xd8] sm:%s913] %v978
                %v980 = vld [vmem:[%s922 + $0xe0] sm:%s913]
                %981 = vst [vmem:[%s923 + $0xe0] sm:%s913] %v980
                %v982 = vld [vmem:[%s922 + $0xe8] sm:%s913]
                %983 = vst [vmem:[%s923 + $0xe8] sm:%s913] %v982
                %v984 = vld [vmem:[%s922 + $0xf0] sm:%s913]
                %985 = vst [vmem:[%s923 + $0xf0] sm:%s913] %v984
                %v986 = vld [vmem:[%s922 + $0xf8] sm:%s913]
                %987 = vst [vmem:[%s923 + $0xf8] sm:%s913] %v986
                %s988 = sadd.s32 1, %s921
                %p989 = scmp.ge.s32.totalorder %s988, %s914
                %s990 = scalar_select %p989, 0, %s988
                %s991 = smul.u32 %s990, 256
                %s992 = smul.u32 %s990, 256
                %s993 = scalar_lea.vmem %s893, %s991 [#allocation2]
                %s994 = scalar_lea.vmem %s904, %s992
              $region77: #{tpu_custom_call.1} parent=71 // loop_footer
                %s918 = sadd.s32 %s916, 1
              $region78: #{tpu_custom_call.1} parent=71 // loop_footer_branch
                %915 = sbr.rel target = $region74
              $region79: #{tpu_custom_call.1} parent=71 // loop_exit
                _
              %s995 = sshrl.u32 %s900, 5
              %s996 = sand.u32 %s900, 31
              %s997 = smul.u32 %s995, 32
              %s998 = smul.u32 8, %s997
              %s999 = scalar_lea.vmem %s893, %s998 [#allocation2]
              %s1000 = smul.u32 8, %s997
              %s1001 = scalar_lea.vmem %s904, %s1000
              // While loop
              $region80: #{tpu_custom_call.1} parent=71 // loop_pre_header
                _
              $region81: #{tpu_custom_call.1} parent=71 // loop_header
                %s1003 = sphi 0, %s1005
                %p1004 = scmp.ge.s32.totalorder %s1003, %s996
                %s1008 = sphi 0, %s1015
                %s1009 = sphi %s999, %s1018
                %s1010 = sphi %s1001, %s1019
              $region82: #{tpu_custom_call.1} parent=71 // loop_header_branch
                %1007 = sbr.rel (%p1004) target = $region86
              $region83: #{tpu_custom_call.1} parent=71 // loop_body
                %v1011 = vld [vmem:[%s1009] sm:%s913]
                %1012 = vst [vmem:[%s1010] sm:%s913] %v1011
                %s1013 = sadd.s32 1, %s1008
                %p1014 = scmp.ge.s32.totalorder %s1013, %s996
                %s1015 = scalar_select %p1014, 0, %s1013
                %s1016 = smul.u32 %s1015, 8
                %s1017 = smul.u32 %s1015, 8
                %s1018 = scalar_lea.vmem %s999, %s1016 [#allocation2]
                %s1019 = scalar_lea.vmem %s1001, %s1017
              $region84: #{tpu_custom_call.1} parent=71 // loop_footer
                %s1005 = sadd.s32 %s1003, 1
              $region85: #{tpu_custom_call.1} parent=71 // loop_footer_branch
                %1002 = sbr.rel target = $region81
              $region86: #{tpu_custom_call.1} parent=71 // loop_exit
                _
            $region72: #{tpu_custom_call.1} parent=63 // pred_fallthru
              _
          $region64: #{tpu_custom_call.1} parent=59 // pred_fallthru
            _
          %1130 = vnop
        $region60: #{tpu_custom_call.1} parent=55 // pred_fallthru
          _
      $region56: #{tpu_custom_call.1} parent=5 // pred_fallthru
        _
      %p1131 = scmp.le.s32.totalorder 2, %s15
      // Predicated region
      $region109: #{tpu_custom_call.1} parent=5 // pred_check
        %p1132 = pneg %p1131
      $region110: #{tpu_custom_call.1} parent=5 // pred_check_branch
        %1134 = sbr.rel (%p1132) target = $region112
      $region111: #{tpu_custom_call.1} parent=5 // pred_region
        %s1135 = ssub.s32 %s15, 2
        // Predicated region
        $region113: #{tpu_custom_call.1} parent=111 // pred_check
          %p1136 = pneg %p238
        $region114: #{tpu_custom_call.1} parent=111 // pred_check_branch
          %1138 = sbr.rel (%p1136) target = $region116
        $region115: #{tpu_custom_call.1} parent=111 // pred_region
          %s1139 = sand.u32 %s223, 1
          %s1140 = sand.u32 %s223, 1
          %s1141 = smul.addr %s1140, 256
          %s1142 = scalar_lea.vmem [#allocation2], %s1141
        $region116: #{tpu_custom_call.1} parent=111 // pred_fallthru
          _
      $region112: #{tpu_custom_call.1} parent=5 // pred_fallthru
        _
    $region6: #{tpu_custom_call.1} parent=1 // loop_footer
      %s19 = sadd.s32 1, %s15
    $region7: #{tpu_custom_call.1} parent=1 // loop_footer_branch
      %14 = sbr.rel target = $region3
    $region8: #{tpu_custom_call.1} parent=1 // loop_exit
      _

</llo_original>
